<compile_context>
chip_gen: v5e
topology: v5e:2x2
jax: 0.10.0
libtpu: 0.0.40
codegen_flags: <defaults>
</compile_context>

<pallas_src>
import math

import numpy as np
import jax
import jax.numpy as jnp
from jax.experimental import pallas as pl
from jax.experimental.pallas import tpu as pltpu


def _interp_matrix(out_size: int, in_size: int, scale: float) -> np.ndarray:
    """1-D bilinear interpolation matrix matching PyTorch align_corners=False."""
    A = np.zeros((out_size, in_size), dtype=np.float32)
    for o in range(out_size):
        src = (o + 0.5) / scale - 0.5
        if src < 0.0:
            src = 0.0  # PyTorch clamps negative source coords to 0
        i0 = int(np.floor(src))
        i0 = min(i0, in_size - 1)
        i1 = min(i0 + 1, in_size - 1)
        w1 = src - i0
        w0 = 1.0 - w1
        A[o, i0] += w0
        A[o, i1] += w1
    return A


def _upsample_kernel(kT_ref, x_ref, o_ref):
    # kT_ref: (H*W, TN)  fused bilinear weight slab (bf16 when lossless, else f32)
    # x_ref:  (TB, H*W)  TB flattened input planes (lane-dense)
    # o_ref:  (TB, TN)   TB flattened output planes (lane-dense, caller dtype)
    x = x_ref[...]
    k = kT_ref[...]
    if x.dtype != k.dtype:
        # Mixed dtypes (e.g. f32 activations with lossless-bf16 weights): promote both
        # to f32 so the MXU sees one well-defined input dtype. The weight cast is exact.
        x = x.astype(jnp.float32)
        k = k.astype(jnp.float32)
    o_ref[...] = jnp.dot(x, k, preferred_element_type=jnp.float32).astype(o_ref.dtype)


def _pick_tn(in_lanes: int, out_lanes: int, kt_itemsize: int,
             budget_bytes: int = 8 * 1024 * 1024) -> int:
    """Output-column tile width for K^T.

    Bounds the (double-buffered) resident weight slab so large planes don't blow
    v7x's 64 MiB/TC; for MNIST-sized planes returns the full width (single fetch,
    stays resident)."""
    if out_lanes % 128 != 0:
        return out_lanes  # keep one full-width (lane-exact) block
    max_tn = budget_bytes // (2 * in_lanes * kt_itemsize)
    if max_tn >= out_lanes:
        return out_lanes
    tn = max(128, (max_tn // 128) * 128)
    while tn > 128 and out_lanes % tn != 0:
        tn -= 128
    return tn if out_lanes % tn == 0 else out_lanes


def _pick_tb(B: int, in_lanes: int, tn: int, x_itemsize: int, out_itemsize: int,
             vmem_budget: int = 16 * 1024 * 1024, target_steps: int = 8,
             tb_floor: int = 32, tb_cap: int = 1024) -> int:
    """Planes per grid step.

    Aim for >= target_steps batch-grid steps (pipeline overlap + both v7x TCs get
    work), keep a floor so the ~0.35us/step overhead is amortized, and cap by a
    conservative VMEM budget (double-buffered in+out slabs)."""
    per_plane = in_lanes * x_itemsize + tn * out_itemsize
    tb_max = max(8, ((vmem_budget // (2 * per_plane)) // 8) * 8)
    b_ceil = ((B + 7) // 8) * 8
    tb_tgt = -(-b_ceil // target_steps)                 # ceil(b_ceil / target_steps)
    tb_tgt = max(tb_floor, ((tb_tgt + 7) // 8) * 8)
    tb = min(tb_max, tb_tgt, b_ceil, tb_cap)
    tb = max(8, (tb // 8) * 8)
    if tb >= B:
        return B  # single batch block: exact size (full-dim block, no padding)
    return tb


def interpolate_bilinear(x: jax.Array, scale_factor: float = 2.0,
                         compute_dtype=None) -> jax.Array:
    """x: (N, C, H, W) -> (N, C, floor(H*s), floor(W*s)), bilinear, align_corners=False.

    compute_dtype: optional activation dtype override (e.g. jnp.bfloat16) for
    MXU-bound parts (v5e); default keeps fp32-exact numerics for f32 callers.
    """
    N, C, H, W = x.shape
    H_out = int(math.floor(H * scale_factor))
    W_out = int(math.floor(W * scale_factor))
    orig_dtype = x.dtype

    in_lanes = H * W
    out_lanes = H_out * W_out

    # Fused interpolation matrix: out[ho*W_out+wo] = sum_{h,w} Ah[ho,h]*Aw[wo,w]*x[h,w]
    a_h = _interp_matrix(H_out, H, scale_factor)            # (H_out, H)
    a_w = _interp_matrix(W_out, W, scale_factor)            # (W_out, W)
    kw = np.ascontiguousarray(np.kron(a_h, a_w).T, dtype=np.float32)  # (H*W, H_out*W_out)
    # Store weights in bf16 when exactly representable (lossless for scale=2, where
    # all weights are k/16): halves weight DMA + resident VMEM with no numeric change.
    bf16_exact = bool(np.all((kw.view(np.uint32) & np.uint32(0xFFFF)) == 0))
    kT = jnp.asarray(kw, dtype=jnp.bfloat16) if bf16_exact else jnp.asarray(kw)

    # Activation dtype: keep 16-bit callers in 16-bit (output is 4x input bytes at
    # scale=2); f32 callers stay f32 unless compute_dtype overrides.
    if compute_dtype is not None:
        xf = x.astype(compute_dtype)
    elif orig_dtype in (jnp.bfloat16, jnp.float16):
        xf = x
    else:
        xf = x.astype(jnp.float32)

    B = N * C
    x_flat = xf.reshape(B, in_lanes)                        # free reshape, lane-dense

    TN = _pick_tn(in_lanes, out_lanes, kT.dtype.itemsize)
    TB = _pick_tb(B, in_lanes, TN, x_flat.dtype.itemsize, orig_dtype.itemsize)
    nb = pl.cdiv(B, TB)          # ragged last batch block handled by Pallas (no pad copy)
    nc = out_lanes // TN

    # Right-size the scoped VMEM limit from the actual (double-buffered) block sizes.
    need = 2 * (TB * in_lanes * x_flat.dtype.itemsize
                + TB * TN * orig_dtype.itemsize
                + in_lanes * TN * kT.dtype.itemsize)
    vmem_limit = int(min(max(need + (4 << 20), 16 << 20), 56 << 20))

    out_flat = pl.pallas_call(
        _upsample_kernel,
        out_shape=jax.ShapeDtypeStruct((B, out_lanes), orig_dtype),
        grid=(nb, nc),
        in_specs=[
            # Weight slab: constant across the batch axis; resident when nc == 1.
            pl.BlockSpec((in_lanes, TN), lambda i, j: (0, j)),
            # TB planes per step; constant across the (inner) column axis -> one fetch.
            pl.BlockSpec((TB, in_lanes), lambda i, j: (i, 0)),
        ],
        out_specs=pl.BlockSpec((TB, TN), lambda i, j: (i, j)),
        compiler_params=pltpu.CompilerParams(
            dimension_semantics=("parallel", "parallel"),
            vmem_limit_bytes=vmem_limit,
        ),
    )(kT, x_flat)

    return out_flat.reshape(N, C, H_out, W_out)


if __name__ == "__main__":
    key = jax.random.PRNGKey(0)
    N, C, H, W = 2, 4, 16, 16
    scale = 2.0
    x = jax.random.normal(key, (N, C, H, W), dtype=jnp.float32)

    out = interpolate_bilinear(x, scale_factor=scale)
    out = jax.block_until_ready(out)

    # Reference: same interpolation matrices applied via float64 numpy einsum on host.
    H_out, W_out = int(H * scale), int(W * scale)
    a_h = _interp_matrix(H_out, H, scale).astype(np.float64)
    a_w = _interp_matrix(W_out, W, scale).astype(np.float64)
    ref = np.einsum("oh,nchw,pw->ncop", a_h, np.asarray(x, dtype=np.float64), a_w)

    assert out.shape == (N, C, H_out, W_out), out.shape
    assert out.dtype == x.dtype, out.dtype
    assert np.allclose(np.asarray(out, dtype=np.float64), ref, atol=1e-4, rtol=1e-4), \
        "mismatch vs reference"

    # Exercise the no-pad ragged path: B = 5*8 = 40 is not a multiple of the chosen
    # TB (32), so the last batch block is partially out of bounds.
    x2 = jax.random.normal(jax.random.PRNGKey(1), (5, 8, H, W), dtype=jnp.float32)
    out2 = jax.block_until_ready(interpolate_bilinear(x2, scale_factor=scale))
    ref2 = np.einsum("oh,nchw,pw->ncop", a_h, np.asarray(x2, dtype=np.float64), a_w)
    assert out2.shape == (5, 8, H_out, W_out), out2.shape
    assert np.allclose(np.asarray(out2, dtype=np.float64), ref2, atol=1e-4, rtol=1e-4), \
        "mismatch vs reference (ragged batch)"

    print("KERNEL_OK")
</pallas_src>

<mosaic_0001>
module attributes {stable_mosaic.version = 11 : i64} {
  func.func @_upsample_kernel(%arg0: i32, %arg1: i32, %arg2: memref<256x1024xbf16, #tpu.memory_space<vmem>>, %arg3: memref<8x256xf32, #tpu.memory_space<vmem>>, %arg4: memref<8x1024xf32, #tpu.memory_space<vmem>>) attributes {dimension_semantics = [#tpu.dimension_semantics<parallel>, #tpu.dimension_semantics<parallel>], iteration_bounds = array<i64: 1, 1>, scalar_prefetch = 0 : i64, scratch_operands = 0 : i64, tpu.core_type = #tpu.core_type<tc>, window_params = [{transform_indices = @transform_0, window_bounds = array<i64: 256, 1024>}, {transform_indices = @transform_1, window_bounds = array<i64: 8, 256>}, {transform_indices = @transform_2, window_bounds = array<i64: 8, 1024>}]} {
    %c0 = arith.constant 0 : index
    %c0_0 = arith.constant 0 : index
    %0 = vector.load %arg3[%c0, %c0_0] : memref<8x256xf32, #tpu.memory_space<vmem>>, vector<8x256xf32>
    %c0_1 = arith.constant 0 : index
    %c0_2 = arith.constant 0 : index
    %1 = vector.load %arg2[%c0_1, %c0_2] : memref<256x1024xbf16, #tpu.memory_space<vmem>>, vector<256x1024xbf16>
    %2 = arith.extf %1 : vector<256x1024xbf16> to vector<256x1024xf32>
    %cst = arith.constant dense<0.000000e+00> : vector<8x1024xf32>
    %3 = tpu.matmul %0, %2, %cst {dimension_numbers = #tpu.dot_dimension_numbers<[1], [0], [0], [1], [0, 0, 1, 1], [], []>} : vector<8x256xf32>, vector<256x1024xf32>, vector<8x1024xf32> -> vector<8x1024xf32>
    %c0_3 = arith.constant 0 : index
    %c0_4 = arith.constant 0 : index
    %4 = vector.load %arg4[%c0_3, %c0_4] : memref<8x1024xf32, #tpu.memory_space<vmem>>, vector<8x1024xf32>
    tpu.vector_store %arg4[%c0_3, %c0_4], %3 {strides = array<i32>} : memref<8x1024xf32, #tpu.memory_space<vmem>>, vector<8x1024xf32>,
    return
  }
  func.func @transform_0(%arg0: i32, %arg1: i32) -> (i32, i32) {
    %c0_i32 = arith.constant 0 : i32
    %c0_i32_0 = arith.constant 0 : i32
    return %c0_i32, %arg1 : i32, i32
  }
  func.func @transform_1(%arg0: i32, %arg1: i32) -> (i32, i32) {
    %c0_i32 = arith.constant 0 : i32
    %c0_i32_0 = arith.constant 0 : i32
    return %arg0, %c0_i32 : i32, i32
  }
  func.func @transform_2(%arg0: i32, %arg1: i32) -> (i32, i32) {
    %c0_i32 = arith.constant 0 : i32
    return %arg0, %arg1 : i32, i32
  }
}

</mosaic_0001>

<llo_original>
// kernel: tpu_custom_call.1
$region0: #{tpu_custom_call.1}
  #allocation0 [shape = 'u32[]', space=smem, size = 0x4, offset = 0x4, fixed_abs, tag = 'smem constant byte address 0x4 - core index']
  #allocation1 [shape = 'u32[72,128]{1,0:T(1,128)}', space=vmem, size = 0x9000, scoped, tag = 'internal scratch']
  %s0 = inlined_call_operand.hbm [shape: bf16[256,1024], index: 0, kind: input, shape index: {}]
  %s1 = inlined_call_operand.hbm [shape: f32[8,256], index: 1, kind: input, shape index: {}]
  %s2 = inlined_call_operand.hbm [shape: f32[8,1024], index: 2, kind: output, shape index: {}]
  %s3 = sld [smem:[#allocation0]]
  $region26: #{tpu_custom_call.1} parent=0
    _
  %s5 = ssub.s32 1, %s3
  %s6 = scalar_select 0, %s5, %s3
  $region1: #{tpu_custom_call.1} parent=0
    #allocation2 [shape = 'u8[524288]{0}', space=vmem, size = 0x80000, scoped, tag = 'input window, operand 0, single buffered']
    #allocation3 [shape = 's32[1]{0}', space=sflag, size = 0x4, scoped, tag = 'scoped memory for tpu_custom_call.1']
    #allocation4 [shape = 's32[1]{0}', space=sflag, size = 0x4, scoped, tag = 'scoped memory for tpu_custom_call.1']
    #allocation5 [shape = 'u8[8192]{0}', space=vmem, size = 0x2000, scoped, tag = 'input window, operand 1, single buffered']
    #allocation6 [shape = 's32[1]{0}', space=sflag, size = 0x4, scoped, tag = 'scoped memory for tpu_custom_call.1']
    #allocation7 [shape = 'u8[32768]{0}', space=vmem, size = 0x8000, scoped, tag = 'output window, operand 0, single buffered']
    %7 = vsyncpa [#allocation3], 0
    %8 = vsyncpa [#allocation6], 0
    %9 = vsyncpa [#allocation4], 0
    // Predicated region
    $region2: #{tpu_custom_call.1} parent=1 // pred_check
      _
    $region3: #{tpu_custom_call.1} parent=1 // pred_check_branch
      %11 = sbr.rel (0) target = $region5
    $region4: #{tpu_custom_call.1} parent=1 // pred_region
      %13 = vsyncadd [#allocation3], 0
      %s14 = sshll.u32 %s0, 4
      %s15 = int_to_ptr.hbm [resolvable:$true] %s14
      %s16 = sshll.u32 [#allocation2], 4
      %s17 = int_to_ptr.vmem [resolvable:$true] %s16
      %22 = dma.hbm_to_vmem [thread:$0]  %s15, 16384, %s17, [#allocation3], 512, 512, 32
    $region5: #{tpu_custom_call.1} parent=1 // pred_fallthru
      _
    // Predicated region
    $region6: #{tpu_custom_call.1} parent=1 // pred_check
      _
    $region7: #{tpu_custom_call.1} parent=1 // pred_check_branch
      %24 = sbr.rel (0) target = $region9
    $region8: #{tpu_custom_call.1} parent=1 // pred_region
      %26 = vsyncadd [#allocation6], 0
      %s28 = sshll.u32 %s1, 4
      %s29 = int_to_ptr.hbm [resolvable:$true] %s28
      %s30 = sshll.u32 [#allocation5], 4
      %s31 = int_to_ptr.vmem [resolvable:$true] %s30
      %33 = dma.hbm_to_vmem [thread:$0]  %s29, 256, %s31, [#allocation6]
    $region9: #{tpu_custom_call.1} parent=1 // pred_fallthru
      _
    // Predicated region
    $region10: #{tpu_custom_call.1} parent=1 // pred_check
      _
    $region11: #{tpu_custom_call.1} parent=1 // pred_check_branch
      %35 = sbr.rel (0) target = $region13
    $region12: #{tpu_custom_call.1} parent=1 // pred_region
      %37 = dma.done [#allocation3], 16384
    $region13: #{tpu_custom_call.1} parent=1 // pred_fallthru
      _
    // Predicated region
    $region14: #{tpu_custom_call.1} parent=1 // pred_check
      _
    $region15: #{tpu_custom_call.1} parent=1 // pred_check_branch
      %39 = sbr.rel (0) target = $region17
    $region16: #{tpu_custom_call.1} parent=1 // pred_region
      %41 = dma.done [#allocation6], 256
    $region17: #{tpu_custom_call.1} parent=1 // pred_fallthru
      _
    %v42 = vld [vmem:[#allocation5] sm:$0xff]
    %v43 = vld [vmem:[#allocation5 + $0x8] sm:$0xff]
    %v44 = vld [vmem:[#allocation2] sm:$0xff]
    %v45 = vld [vmem:[#allocation2 + $0x8] sm:$0xff]
    %v46 = vld [vmem:[#allocation2 + $0x10] sm:$0xff]
    %v47 = vld [vmem:[#allocation2 + $0x18] sm:$0xff]
    %v48 = vld [vmem:[#allocation2 + $0x20] sm:$0xff]
    %v49 = vld [vmem:[#allocation2 + $0x28] sm:$0xff]
    %v50 = vld [vmem:[#allocation2 + $0x30] sm:$0xff]
    %v51 = vld [vmem:[#allocation2 + $0x38] sm:$0xff]
    %v52 = vld [vmem:[#allocation2 + $0x40] sm:$0xff]
    %v53 = vld [vmem:[#allocation2 + $0x48] sm:$0xff]
    %v54 = vld [vmem:[#allocation2 + $0x50] sm:$0xff]
    %v55 = vld [vmem:[#allocation2 + $0x58] sm:$0xff]
    %v56 = vld [vmem:[#allocation2 + $0x60] sm:$0xff]
    %v57 = vld [vmem:[#allocation2 + $0x68] sm:$0xff]
    %v58 = vld [vmem:[#allocation2 + $0x70] sm:$0xff]
    %v59 = vld [vmem:[#allocation2 + $0x78] sm:$0xff]
    %v60 = vld [vmem:[#allocation2 + $0x80] sm:$0xff]
    %v61 = vld [vmem:[#allocation2 + $0x88] sm:$0xff]
    %v62 = vld [vmem:[#allocation2 + $0x90] sm:$0xff]
    %v63 = vld [vmem:[#allocation2 + $0x98] sm:$0xff]
    %v64 = vld [vmem:[#allocation2 + $0xa0] sm:$0xff]
    %v65 = vld [vmem:[#allocation2 + $0xa8] sm:$0xff]
    %v66 = vld [vmem:[#allocation2 + $0xb0] sm:$0xff]
    %v67 = vld [vmem:[#allocation2 + $0xb8] sm:$0xff]
    %v68 = vld [vmem:[#allocation2 + $0xc0] sm:$0xff]
    %v69 = vld [vmem:[#allocation2 + $0xc8] sm:$0xff]
    %v70 = vld [vmem:[#allocation2 + $0xd0] sm:$0xff]
    %v71 = vld [vmem:[#allocation2 + $0xd8] sm:$0xff]
    %v72 = vld [vmem:[#allocation2 + $0xe0] sm:$0xff]
    %v73 = vld [vmem:[#allocation2 + $0xe8] sm:$0xff]
    %v74 = vld [vmem:[#allocation2 + $0xf0] sm:$0xff]
    %v75 = vld [vmem:[#allocation2 + $0xf8] sm:$0xff]
    %v76 = vld [vmem:[#allocation2 + $0x100] sm:$0xff]
    %v77 = vld [vmem:[#allocation2 + $0x108] sm:$0xff]
    %v78 = vld [vmem:[#allocation2 + $0x110] sm:$0xff]
    %v79 = vld [vmem:[#allocation2 + $0x118] sm:$0xff]
    %v80 = vld [vmem:[#allocation2 + $0x120] sm:$0xff]
    %v81 = vld [vmem:[#allocation2 + $0x128] sm:$0xff]
    %v82 = vld [vmem:[#allocation2 + $0x130] sm:$0xff]
    %v83 = vld [vmem:[#allocation2 + $0x138] sm:$0xff]
    %v84 = vld [vmem:[#allocation2 + $0x140] sm:$0xff]
    %v85 = vld [vmem:[#allocation2 + $0x148] sm:$0xff]
    %v86 = vld [vmem:[#allocation2 + $0x150] sm:$0xff]
    %v87 = vld [vmem:[#allocation2 + $0x158] sm:$0xff]
    %v88 = vld [vmem:[#allocation2 + $0x160] sm:$0xff]
    %v89 = vld [vmem:[#allocation2 + $0x168] sm:$0xff]
    %v90 = vld [vmem:[#allocation2 + $0x170] sm:$0xff]
    %v91 = vld [vmem:[#allocation2 + $0x178] sm:$0xff]
    %v92 = vld [vmem:[#allocation2 + $0x180] sm:$0xff]
    %v93 = vld [vmem:[#allocation2 + $0x188] sm:$0xff]
    %v94 = vld [vmem:[#allocation2 + $0x190] sm:$0xff]
    %v95 = vld [vmem:[#allocation2 + $0x198] sm:$0xff]
    %v96 = vld [vmem:[#allocation2 + $0x1a0] sm:$0xff]
    %v97 = vld [vmem:[#allocation2 + $0x1a8] sm:$0xff]
    %v98 = vld [vmem:[#allocation2 + $0x1b0] sm:$0xff]
    %v99 = vld [vmem:[#allocation2 + $0x1b8] sm:$0xff]
    %v100 = vld [vmem:[#allocation2 + $0x1c0] sm:$0xff]
    %v101 = vld [vmem:[#allocation2 + $0x1c8] sm:$0xff]
    %v102 = vld [vmem:[#allocation2 + $0x1d0] sm:$0xff]
    %v103 = vld [vmem:[#allocation2 + $0x1d8] sm:$0xff]
    %v104 = vld [vmem:[#allocation2 + $0x1e0] sm:$0xff]
    %v105 = vld [vmem:[#allocation2 + $0x1e8] sm:$0xff]
    %v106 = vld [vmem:[#allocation2 + $0x1f0] sm:$0xff]
    %v107 = vld [vmem:[#allocation2 + $0x1f8] sm:$0xff]
    %v108 = vld [vmem:[#allocation2 + $0x200] sm:$0xff]
    %v109 = vld [vmem:[#allocation2 + $0x208] sm:$0xff]
    %v110 = vld [vmem:[#allocation2 + $0x210] sm:$0xff]
    %v111 = vld [vmem:[#allocation2 + $0x218] sm:$0xff]
    %v112 = vld [vmem:[#allocation2 + $0x220] sm:$0xff]
    %v113 = vld [vmem:[#allocation2 + $0x228] sm:$0xff]
    %v114 = vld [vmem:[#allocation2 + $0x230] sm:$0xff]
    %v115 = vld [vmem:[#allocation2 + $0x238] sm:$0xff]
    %v116 = vld [vmem:[#allocation2 + $0x240] sm:$0xff]
    %v117 = vld [vmem:[#allocation2 + $0x248] sm:$0xff]
    %v118 = vld [vmem:[#allocation2 + $0x250] sm:$0xff]
    %v119 = vld [vmem:[#allocation2 + $0x258] sm:$0xff]
    %v120 = vld [vmem:[#allocation2 + $0x260] sm:$0xff]
    %v121 = vld [vmem:[#allocation2 + $0x268] sm:$0xff]
    %v122 = vld [vmem:[#allocation2 + $0x270] sm:$0xff]
    %v123 = vld [vmem:[#allocation2 + $0x278] sm:$0xff]
    %v124 = vld [vmem:[#allocation2 + $0x280] sm:$0xff]
    %v125 = vld [vmem:[#allocation2 + $0x288] sm:$0xff]
    %v126 = vld [vmem:[#allocation2 + $0x290] sm:$0xff]
    %v127 = vld [vmem:[#allocation2 + $0x298] sm:$0xff]
    %v128 = vld [vmem:[#allocation2 + $0x2a0] sm:$0xff]
    %v129 = vld [vmem:[#allocation2 + $0x2a8] sm:$0xff]
    %v130 = vld [vmem:[#allocation2 + $0x2b0] sm:$0xff]
    %v131 = vld [vmem:[#allocation2 + $0x2b8] sm:$0xff]
    %v132 = vld [vmem:[#allocation2 + $0x2c0] sm:$0xff]
    %v133 = vld [vmem:[#allocation2 + $0x2c8] sm:$0xff]
    %v134 = vld [vmem:[#allocation2 + $0x2d0] sm:$0xff]
    %v135 = vld [vmem:[#allocation2 + $0x2d8] sm:$0xff]
    %v136 = vld [vmem:[#allocation2 + $0x2e0] sm:$0xff]
    %v137 = vld [vmem:[#allocation2 + $0x2e8] sm:$0xff]
    %v138 = vld [vmem:[#allocation2 + $0x2f0] sm:$0xff]
    %v139 = vld [vmem:[#allocation2 + $0x2f8] sm:$0xff]
    %v140 = vld [vmem:[#allocation2 + $0x300] sm:$0xff]
    %v141 = vld [vmem:[#allocation2 + $0x308] sm:$0xff]
    %v142 = vld [vmem:[#allocation2 + $0x310] sm:$0xff]
    %v143 = vld [vmem:[#allocation2 + $0x318] sm:$0xff]
    %v144 = vld [vmem:[#allocation2 + $0x320] sm:$0xff]
    %v145 = vld [vmem:[#allocation2 + $0x328] sm:$0xff]
    %v146 = vld [vmem:[#allocation2 + $0x330] sm:$0xff]
    %v147 = vld [vmem:[#allocation2 + $0x338] sm:$0xff]
    %v148 = vld [vmem:[#allocation2 + $0x340] sm:$0xff]
    %v149 = vld [vmem:[#allocation2 + $0x348] sm:$0xff]
    %v150 = vld [vmem:[#allocation2 + $0x350] sm:$0xff]
    %v151 = vld [vmem:[#allocation2 + $0x358] sm:$0xff]
    %v152 = vld [vmem:[#allocation2 + $0x360] sm:$0xff]
    %v153 = vld [vmem:[#allocation2 + $0x368] sm:$0xff]
    %v154 = vld [vmem:[#allocation2 + $0x370] sm:$0xff]
    %v155 = vld [vmem:[#allocation2 + $0x378] sm:$0xff]
    %v156 = vld [vmem:[#allocation2 + $0x380] sm:$0xff]
    %v157 = vld [vmem:[#allocation2 + $0x388] sm:$0xff]
    %v158 = vld [vmem:[#allocation2 + $0x390] sm:$0xff]
    %v159 = vld [vmem:[#allocation2 + $0x398] sm:$0xff]
    %v160 = vld [vmem:[#allocation2 + $0x3a0] sm:$0xff]
    %v161 = vld [vmem:[#allocation2 + $0x3a8] sm:$0xff]
    %v162 = vld [vmem:[#allocation2 + $0x3b0] sm:$0xff]
    %v163 = vld [vmem:[#allocation2 + $0x3b8] sm:$0xff]
    %v164 = vld [vmem:[#allocation2 + $0x3c0] sm:$0xff]
    %v165 = vld [vmem:[#allocation2 + $0x3c8] sm:$0xff]
    %v166 = vld [vmem:[#allocation2 + $0x3d0] sm:$0xff]
    %v167 = vld [vmem:[#allocation2 + $0x3d8] sm:$0xff]
    %v168 = vld [vmem:[#allocation2 + $0x3e0] sm:$0xff]
    %v169 = vld [vmem:[#allocation2 + $0x3e8] sm:$0xff]
    %v170 = vld [vmem:[#allocation2 + $0x3f0] sm:$0xff]
    %v171 = vld [vmem:[#allocation2 + $0x3f8] sm:$0xff]
    %v172 = vunpack.c.l.bf16 %v44
    %v173 = vunpack.c.h.bf16 %v44
    %v174 = vunpack.c.l.bf16 %v45
    %v175 = vunpack.c.h.bf16 %v45
    %v176 = vunpack.c.l.bf16 %v46
    %v177 = vunpack.c.h.bf16 %v46
    %v178 = vunpack.c.l.bf16 %v47
    %v179 = vunpack.c.h.bf16 %v47
    %v180 = vunpack.c.l.bf16 %v48
    %v181 = vunpack.c.h.bf16 %v48
    %v182 = vunpack.c.l.bf16 %v49
    %v183 = vunpack.c.h.bf16 %v49
    %v184 = vunpack.c.l.bf16 %v50
    %v185 = vunpack.c.h.bf16 %v50
    %v186 = vunpack.c.l.bf16 %v51
    %v187 = vunpack.c.h.bf16 %v51
    %v188 = vunpack.c.l.bf16 %v52
    %v189 = vunpack.c.h.bf16 %v52
    %v190 = vunpack.c.l.bf16 %v53
    %v191 = vunpack.c.h.bf16 %v53
    %v192 = vunpack.c.l.bf16 %v54
    %v193 = vunpack.c.h.bf16 %v54
    %v194 = vunpack.c.l.bf16 %v55
    %v195 = vunpack.c.h.bf16 %v55
    %v196 = vunpack.c.l.bf16 %v56
    %v197 = vunpack.c.h.bf16 %v56
    %v198 = vunpack.c.l.bf16 %v57
    %v199 = vunpack.c.h.bf16 %v57
    %v200 = vunpack.c.l.bf16 %v58
    %v201 = vunpack.c.h.bf16 %v58
    %v202 = vunpack.c.l.bf16 %v59
    %v203 = vunpack.c.h.bf16 %v59
    %v204 = vunpack.c.l.bf16 %v60
    %v205 = vunpack.c.h.bf16 %v60
    %v206 = vunpack.c.l.bf16 %v61
    %v207 = vunpack.c.h.bf16 %v61
    %v208 = vunpack.c.l.bf16 %v62
    %v209 = vunpack.c.h.bf16 %v62
    %v210 = vunpack.c.l.bf16 %v63
    %v211 = vunpack.c.h.bf16 %v63
    %v212 = vunpack.c.l.bf16 %v64
    %v213 = vunpack.c.h.bf16 %v64
    %v214 = vunpack.c.l.bf16 %v65
    %v215 = vunpack.c.h.bf16 %v65
    %v216 = vunpack.c.l.bf16 %v66
    %v217 = vunpack.c.h.bf16 %v66
    %v218 = vunpack.c.l.bf16 %v67
    %v219 = vunpack.c.h.bf16 %v67
    %v220 = vunpack.c.l.bf16 %v68
    %v221 = vunpack.c.h.bf16 %v68
    %v222 = vunpack.c.l.bf16 %v69
    %v223 = vunpack.c.h.bf16 %v69
    %v224 = vunpack.c.l.bf16 %v70
    %v225 = vunpack.c.h.bf16 %v70
    %v226 = vunpack.c.l.bf16 %v71
    %v227 = vunpack.c.h.bf16 %v71
    %v228 = vunpack.c.l.bf16 %v72
    %v229 = vunpack.c.h.bf16 %v72
    %v230 = vunpack.c.l.bf16 %v73
    %v231 = vunpack.c.h.bf16 %v73
    %v232 = vunpack.c.l.bf16 %v74
    %v233 = vunpack.c.h.bf16 %v74
    %v234 = vunpack.c.l.bf16 %v75
    %v235 = vunpack.c.h.bf16 %v75
    %v236 = vunpack.c.l.bf16 %v76
    %v237 = vunpack.c.h.bf16 %v76
    %v238 = vunpack.c.l.bf16 %v77
    %v239 = vunpack.c.h.bf16 %v77
    %v240 = vunpack.c.l.bf16 %v78
    %v241 = vunpack.c.h.bf16 %v78
    %v242 = vunpack.c.l.bf16 %v79
    %v243 = vunpack.c.h.bf16 %v79
    %v244 = vunpack.c.l.bf16 %v80
    %v245 = vunpack.c.h.bf16 %v80
    %v246 = vunpack.c.l.bf16 %v81
    %v247 = vunpack.c.h.bf16 %v81
    %v248 = vunpack.c.l.bf16 %v82
    %v249 = vunpack.c.h.bf16 %v82
    %v250 = vunpack.c.l.bf16 %v83
    %v251 = vunpack.c.h.bf16 %v83
    %v252 = vunpack.c.l.bf16 %v84
    %v253 = vunpack.c.h.bf16 %v84
    %v254 = vunpack.c.l.bf16 %v85
    %v255 = vunpack.c.h.bf16 %v85
    %v256 = vunpack.c.l.bf16 %v86
    %v257 = vunpack.c.h.bf16 %v86
    %v258 = vunpack.c.l.bf16 %v87
    %v259 = vunpack.c.h.bf16 %v87
    %v260 = vunpack.c.l.bf16 %v88
    %v261 = vunpack.c.h.bf16 %v88
    %v262 = vunpack.c.l.bf16 %v89
    %v263 = vunpack.c.h.bf16 %v89
    %v264 = vunpack.c.l.bf16 %v90
    %v265 = vunpack.c.h.bf16 %v90
    %v266 = vunpack.c.l.bf16 %v91
    %v267 = vunpack.c.h.bf16 %v91
    %v268 = vunpack.c.l.bf16 %v92
    %v269 = vunpack.c.h.bf16 %v92
    %v270 = vunpack.c.l.bf16 %v93
    %v271 = vunpack.c.h.bf16 %v93
    %v272 = vunpack.c.l.bf16 %v94
    %v273 = vunpack.c.h.bf16 %v94
    %v274 = vunpack.c.l.bf16 %v95
    %v275 = vunpack.c.h.bf16 %v95
    %v276 = vunpack.c.l.bf16 %v96
    %v277 = vunpack.c.h.bf16 %v96
    %v278 = vunpack.c.l.bf16 %v97
    %v279 = vunpack.c.h.bf16 %v97
    %v280 = vunpack.c.l.bf16 %v98
    %v281 = vunpack.c.h.bf16 %v98
    %v282 = vunpack.c.l.bf16 %v99
    %v283 = vunpack.c.h.bf16 %v99
    %v284 = vunpack.c.l.bf16 %v100
    %v285 = vunpack.c.h.bf16 %v100
    %v286 = vunpack.c.l.bf16 %v101
    %v287 = vunpack.c.h.bf16 %v101
    %v288 = vunpack.c.l.bf16 %v102
    %v289 = vunpack.c.h.bf16 %v102
    %v290 = vunpack.c.l.bf16 %v103
    %v291 = vunpack.c.h.bf16 %v103
    %v292 = vunpack.c.l.bf16 %v104
    %v293 = vunpack.c.h.bf16 %v104
    %v294 = vunpack.c.l.bf16 %v105
    %v295 = vunpack.c.h.bf16 %v105
    %v296 = vunpack.c.l.bf16 %v106
    %v297 = vunpack.c.h.bf16 %v106
    %v298 = vunpack.c.l.bf16 %v107
    %v299 = vunpack.c.h.bf16 %v107
    %v300 = vunpack.c.l.bf16 %v108
    %v301 = vunpack.c.h.bf16 %v108
    %v302 = vunpack.c.l.bf16 %v109
    %v303 = vunpack.c.h.bf16 %v109
    %v304 = vunpack.c.l.bf16 %v110
    %v305 = vunpack.c.h.bf16 %v110
    %v306 = vunpack.c.l.bf16 %v111
    %v307 = vunpack.c.h.bf16 %v111
    %v308 = vunpack.c.l.bf16 %v112
    %v309 = vunpack.c.h.bf16 %v112
    %v310 = vunpack.c.l.bf16 %v113
    %v311 = vunpack.c.h.bf16 %v113
    %v312 = vunpack.c.l.bf16 %v114
    %v313 = vunpack.c.h.bf16 %v114
    %v314 = vunpack.c.l.bf16 %v115
    %v315 = vunpack.c.h.bf16 %v115
    %v316 = vunpack.c.l.bf16 %v116
    %v317 = vunpack.c.h.bf16 %v116
    %v318 = vunpack.c.l.bf16 %v117
    %v319 = vunpack.c.h.bf16 %v117
    %v320 = vunpack.c.l.bf16 %v118
    %v321 = vunpack.c.h.bf16 %v118
    %v322 = vunpack.c.l.bf16 %v119
    %v323 = vunpack.c.h.bf16 %v119
    %v324 = vunpack.c.l.bf16 %v120
    %v325 = vunpack.c.h.bf16 %v120
    %v326 = vunpack.c.l.bf16 %v121
    %v327 = vunpack.c.h.bf16 %v121
    %v328 = vunpack.c.l.bf16 %v122
    %v329 = vunpack.c.h.bf16 %v122
    %v330 = vunpack.c.l.bf16 %v123
    %v331 = vunpack.c.h.bf16 %v123
    %v332 = vunpack.c.l.bf16 %v124
    %v333 = vunpack.c.h.bf16 %v124
    %v334 = vunpack.c.l.bf16 %v125
    %v335 = vunpack.c.h.bf16 %v125
    %v336 = vunpack.c.l.bf16 %v126
    %v337 = vunpack.c.h.bf16 %v126
    %v338 = vunpack.c.l.bf16 %v127
    %v339 = vunpack.c.h.bf16 %v127
    %v340 = vunpack.c.l.bf16 %v128
    %v341 = vunpack.c.h.bf16 %v128
    %v342 = vunpack.c.l.bf16 %v129
    %v343 = vunpack.c.h.bf16 %v129
    %v344 = vunpack.c.l.bf16 %v130
    %v345 = vunpack.c.h.bf16 %v130
    %v346 = vunpack.c.l.bf16 %v131
    %v347 = vunpack.c.h.bf16 %v131
    %v348 = vunpack.c.l.bf16 %v132
    %v349 = vunpack.c.h.bf16 %v132
    %v350 = vunpack.c.l.bf16 %v133
    %v351 = vunpack.c.h.bf16 %v133
    %v352 = vunpack.c.l.bf16 %v134
    %v353 = vunpack.c.h.bf16 %v134
    %v354 = vunpack.c.l.bf16 %v135
    %v355 = vunpack.c.h.bf16 %v135
    %v356 = vunpack.c.l.bf16 %v136
    %v357 = vunpack.c.h.bf16 %v136
    %v358 = vunpack.c.l.bf16 %v137
    %v359 = vunpack.c.h.bf16 %v137
    %v360 = vunpack.c.l.bf16 %v138
    %v361 = vunpack.c.h.bf16 %v138
    %v362 = vunpack.c.l.bf16 %v139
    %v363 = vunpack.c.h.bf16 %v139
    %v364 = vunpack.c.l.bf16 %v140
    %v365 = vunpack.c.h.bf16 %v140
    %v366 = vunpack.c.l.bf16 %v141
    %v367 = vunpack.c.h.bf16 %v141
    %v368 = vunpack.c.l.bf16 %v142
    %v369 = vunpack.c.h.bf16 %v142
    %v370 = vunpack.c.l.bf16 %v143
    %v371 = vunpack.c.h.bf16 %v143
    %v372 = vunpack.c.l.bf16 %v144
    %v373 = vunpack.c.h.bf16 %v144
    %v374 = vunpack.c.l.bf16 %v145
    %v375 = vunpack.c.h.bf16 %v145
    %v376 = vunpack.c.l.bf16 %v146
    %v377 = vunpack.c.h.bf16 %v146
    %v378 = vunpack.c.l.bf16 %v147
    %v379 = vunpack.c.h.bf16 %v147
    %v380 = vunpack.c.l.bf16 %v148
    %v381 = vunpack.c.h.bf16 %v148
    %v382 = vunpack.c.l.bf16 %v149
    %v383 = vunpack.c.h.bf16 %v149
    %v384 = vunpack.c.l.bf16 %v150
    %v385 = vunpack.c.h.bf16 %v150
    %v386 = vunpack.c.l.bf16 %v151
    %v387 = vunpack.c.h.bf16 %v151
    %v388 = vunpack.c.l.bf16 %v152
    %v389 = vunpack.c.h.bf16 %v152
    %v390 = vunpack.c.l.bf16 %v153
    %v391 = vunpack.c.h.bf16 %v153
    %v392 = vunpack.c.l.bf16 %v154
    %v393 = vunpack.c.h.bf16 %v154
    %v394 = vunpack.c.l.bf16 %v155
    %v395 = vunpack.c.h.bf16 %v155
    %v396 = vunpack.c.l.bf16 %v156
    %v397 = vunpack.c.h.bf16 %v156
    %v398 = vunpack.c.l.bf16 %v157
    %v399 = vunpack.c.h.bf16 %v157
    %v400 = vunpack.c.l.bf16 %v158
    %v401 = vunpack.c.h.bf16 %v158
    %v402 = vunpack.c.l.bf16 %v159
    %v403 = vunpack.c.h.bf16 %v159
    %v404 = vunpack.c.l.bf16 %v160
    %v405 = vunpack.c.h.bf16 %v160
    %v406 = vunpack.c.l.bf16 %v161
    %v407 = vunpack.c.h.bf16 %v161
    %v408 = vunpack.c.l.bf16 %v162
    %v409 = vunpack.c.h.bf16 %v162
    %v410 = vunpack.c.l.bf16 %v163
    %v411 = vunpack.c.h.bf16 %v163
    %v412 = vunpack.c.l.bf16 %v164
    %v413 = vunpack.c.h.bf16 %v164
    %v414 = vunpack.c.l.bf16 %v165
    %v415 = vunpack.c.h.bf16 %v165
    %v416 = vunpack.c.l.bf16 %v166
    %v417 = vunpack.c.h.bf16 %v166
    %v418 = vunpack.c.l.bf16 %v167
    %v419 = vunpack.c.h.bf16 %v167
    %v420 = vunpack.c.l.bf16 %v168
    %v421 = vunpack.c.h.bf16 %v168
    %v422 = vunpack.c.l.bf16 %v169
    %v423 = vunpack.c.h.bf16 %v169
    %v424 = vunpack.c.l.bf16 %v170
    %v425 = vunpack.c.h.bf16 %v170
    %v426 = vunpack.c.l.bf16 %v171
    %v427 = vunpack.c.h.bf16 %v171
    %428 = vmatpush.msra.mxu0 %v292
    %429 = vmatpush.msra.mxu0 %v284
    %430 = vmatpush.msra.mxu0 %v276
    %431 = vmatpush.msra.mxu0 %v268
    %432 = vmatpush.msra.mxu0 %v260
    %433 = vmatpush.msra.mxu0 %v252
    %434 = vmatpush.msra.mxu0 %v244
    %435 = vmatpush.msra.mxu0 %v236
    %436 = vmatpush.msra.mxu0 %v228
    %437 = vmatpush.msra.mxu0 %v220
    %438 = vmatpush.msra.mxu0 %v212
    %439 = vmatpush.msra.mxu0 %v204
    %440 = vmatpush.msra.mxu0 %v196
    %441 = vmatpush.msra.mxu0 %v188
    %442 = vmatpush.msra.mxu0 %v180
    %443 = vmatpush.msra.mxu0 %v172
    %444 = vmatmul.f32.gmra.mxu0 %v42
    %v445 = vpop.f32.mrf.mxu0
    %v446 = vadd.f32 0.0, %v445
    %447 = vdwg.mxu0
    %448 = vmatpush.msra.mxu0 %v420
    %449 = vmatpush.msra.mxu0 %v412
    %450 = vmatpush.msra.mxu0 %v404
    %451 = vmatpush.msra.mxu0 %v396
    %452 = vmatpush.msra.mxu0 %v388
    %453 = vmatpush.msra.mxu0 %v380
    %454 = vmatpush.msra.mxu0 %v372
    %455 = vmatpush.msra.mxu0 %v364
    %456 = vmatpush.msra.mxu0 %v356
    %457 = vmatpush.msra.mxu0 %v348
    %458 = vmatpush.msra.mxu0 %v340
    %459 = vmatpush.msra.mxu0 %v332
    %460 = vmatpush.msra.mxu0 %v324
    %461 = vmatpush.msra.mxu0 %v316
    %462 = vmatpush.msra.mxu0 %v308
    %463 = vmatpush.msra.mxu0 %v300
    %464 = vmatmul.f32.gmra.mxu0 %v43
    %v465 = vpop.f32.mrf.mxu0
    %v466 = vadd.f32 %v446, %v465
    %467 = vdwg.mxu0
    %468 = vmatpush.msra.mxu0 %v293
    %469 = vmatpush.msra.mxu0 %v285
    %470 = vmatpush.msra.mxu0 %v277
    %471 = vmatpush.msra.mxu0 %v269
    %472 = vmatpush.msra.mxu0 %v261
    %473 = vmatpush.msra.mxu0 %v253
    %474 = vmatpush.msra.mxu0 %v245
    %475 = vmatpush.msra.mxu0 %v237
    %476 = vmatpush.msra.mxu0 %v229
    %477 = vmatpush.msra.mxu0 %v221
    %478 = vmatpush.msra.mxu0 %v213
    %479 = vmatpush.msra.mxu0 %v205
    %480 = vmatpush.msra.mxu0 %v197
    %481 = vmatpush.msra.mxu0 %v189
    %482 = vmatpush.msra.mxu0 %v181
    %483 = vmatpush.msra.mxu0 %v173
    %484 = vmatmul.f32.gmra.mxu0 %v42
    %v485 = vpop.f32.mrf.mxu0
    %v486 = vadd.f32 0.0, %v485
    %487 = vdwg.mxu0
    %488 = vmatpush.msra.mxu0 %v421
    %489 = vmatpush.msra.mxu0 %v413
    %490 = vmatpush.msra.mxu0 %v405
    %491 = vmatpush.msra.mxu0 %v397
    %492 = vmatpush.msra.mxu0 %v389
    %493 = vmatpush.msra.mxu0 %v381
    %494 = vmatpush.msra.mxu0 %v373
    %495 = vmatpush.msra.mxu0 %v365
    %496 = vmatpush.msra.mxu0 %v357
    %497 = vmatpush.msra.mxu0 %v349
    %498 = vmatpush.msra.mxu0 %v341
    %499 = vmatpush.msra.mxu0 %v333
    %500 = vmatpush.msra.mxu0 %v325
    %501 = vmatpush.msra.mxu0 %v317
    %502 = vmatpush.msra.mxu0 %v309
    %503 = vmatpush.msra.mxu0 %v301
    %504 = vmatmul.f32.gmra.mxu0 %v43
    %v505 = vpop.f32.mrf.mxu0
    %v506 = vadd.f32 %v486, %v505
    %507 = vdwg.mxu0
    %508 = vmatpush.msra.mxu0 %v294
    %509 = vmatpush.msra.mxu0 %v286
    %510 = vmatpush.msra.mxu0 %v278
    %511 = vmatpush.msra.mxu0 %v270
    %512 = vmatpush.msra.mxu0 %v262
    %513 = vmatpush.msra.mxu0 %v254
    %514 = vmatpush.msra.mxu0 %v246
    %515 = vmatpush.msra.mxu0 %v238
    %516 = vmatpush.msra.mxu0 %v230
    %517 = vmatpush.msra.mxu0 %v222
    %518 = vmatpush.msra.mxu0 %v214
    %519 = vmatpush.msra.mxu0 %v206
    %520 = vmatpush.msra.mxu0 %v198
    %521 = vmatpush.msra.mxu0 %v190
    %522 = vmatpush.msra.mxu0 %v182
    %523 = vmatpush.msra.mxu0 %v174
    %524 = vmatmul.f32.gmra.mxu0 %v42
    %v525 = vpop.f32.mrf.mxu0
    %v526 = vadd.f32 0.0, %v525
    %527 = vdwg.mxu0
    %528 = vmatpush.msra.mxu0 %v422
    %529 = vmatpush.msra.mxu0 %v414
    %530 = vmatpush.msra.mxu0 %v406
    %531 = vmatpush.msra.mxu0 %v398
    %532 = vmatpush.msra.mxu0 %v390
    %533 = vmatpush.msra.mxu0 %v382
    %534 = vmatpush.msra.mxu0 %v374
    %535 = vmatpush.msra.mxu0 %v366
    %536 = vmatpush.msra.mxu0 %v358
    %537 = vmatpush.msra.mxu0 %v350
    %538 = vmatpush.msra.mxu0 %v342
    %539 = vmatpush.msra.mxu0 %v334
    %540 = vmatpush.msra.mxu0 %v326
    %541 = vmatpush.msra.mxu0 %v318
    %542 = vmatpush.msra.mxu0 %v310
    %543 = vmatpush.msra.mxu0 %v302
    %544 = vmatmul.f32.gmra.mxu0 %v43
    %v545 = vpop.f32.mrf.mxu0
    %v546 = vadd.f32 %v526, %v545
    %547 = vdwg.mxu0
    %548 = vmatpush.msra.mxu0 %v295
    %549 = vmatpush.msra.mxu0 %v287
    %550 = vmatpush.msra.mxu0 %v279
    %551 = vmatpush.msra.mxu0 %v271
    %552 = vmatpush.msra.mxu0 %v263
    %553 = vmatpush.msra.mxu0 %v255
    %554 = vmatpush.msra.mxu0 %v247
    %555 = vmatpush.msra.mxu0 %v239
    %556 = vmatpush.msra.mxu0 %v231
    %557 = vmatpush.msra.mxu0 %v223
    %558 = vmatpush.msra.mxu0 %v215
    %559 = vmatpush.msra.mxu0 %v207
    %560 = vmatpush.msra.mxu0 %v199
    %561 = vmatpush.msra.mxu0 %v191
    %562 = vmatpush.msra.mxu0 %v183
    %563 = vmatpush.msra.mxu0 %v175
    %564 = vmatmul.f32.gmra.mxu0 %v42
    %v565 = vpop.f32.mrf.mxu0
    %v566 = vadd.f32 0.0, %v565
    %567 = vdwg.mxu0
    %568 = vmatpush.msra.mxu0 %v423
    %569 = vmatpush.msra.mxu0 %v415
    %570 = vmatpush.msra.mxu0 %v407
    %571 = vmatpush.msra.mxu0 %v399
    %572 = vmatpush.msra.mxu0 %v391
    %573 = vmatpush.msra.mxu0 %v383
    %574 = vmatpush.msra.mxu0 %v375
    %575 = vmatpush.msra.mxu0 %v367
    %576 = vmatpush.msra.mxu0 %v359
    %577 = vmatpush.msra.mxu0 %v351
    %578 = vmatpush.msra.mxu0 %v343
    %579 = vmatpush.msra.mxu0 %v335
    %580 = vmatpush.msra.mxu0 %v327
    %581 = vmatpush.msra.mxu0 %v319
    %582 = vmatpush.msra.mxu0 %v311
    %583 = vmatpush.msra.mxu0 %v303
    %584 = vmatmul.f32.gmra.mxu0 %v43
    %v585 = vpop.f32.mrf.mxu0
    %v586 = vadd.f32 %v566, %v585
    %587 = vdwg.mxu0
    %588 = vmatpush.msra.mxu0 %v296
    %589 = vmatpush.msra.mxu0 %v288
    %590 = vmatpush.msra.mxu0 %v280
    %591 = vmatpush.msra.mxu0 %v272
    %592 = vmatpush.msra.mxu0 %v264
    %593 = vmatpush.msra.mxu0 %v256
    %594 = vmatpush.msra.mxu0 %v248
    %595 = vmatpush.msra.mxu0 %v240
    %596 = vmatpush.msra.mxu0 %v232
    %597 = vmatpush.msra.mxu0 %v224
    %598 = vmatpush.msra.mxu0 %v216
    %599 = vmatpush.msra.mxu0 %v208
    %600 = vmatpush.msra.mxu0 %v200
    %601 = vmatpush.msra.mxu0 %v192
    %602 = vmatpush.msra.mxu0 %v184
    %603 = vmatpush.msra.mxu0 %v176
    %604 = vmatmul.f32.gmra.mxu0 %v42
    %v605 = vpop.f32.mrf.mxu0
    %v606 = vadd.f32 0.0, %v605
    %607 = vdwg.mxu0
    %608 = vmatpush.msra.mxu0 %v424
    %609 = vmatpush.msra.mxu0 %v416
    %610 = vmatpush.msra.mxu0 %v408
    %611 = vmatpush.msra.mxu0 %v400
    %612 = vmatpush.msra.mxu0 %v392
    %613 = vmatpush.msra.mxu0 %v384
    %614 = vmatpush.msra.mxu0 %v376
    %615 = vmatpush.msra.mxu0 %v368
    %616 = vmatpush.msra.mxu0 %v360
    %617 = vmatpush.msra.mxu0 %v352
    %618 = vmatpush.msra.mxu0 %v344
    %619 = vmatpush.msra.mxu0 %v336
    %620 = vmatpush.msra.mxu0 %v328
    %621 = vmatpush.msra.mxu0 %v320
    %622 = vmatpush.msra.mxu0 %v312
    %623 = vmatpush.msra.mxu0 %v304
    %624 = vmatmul.f32.gmra.mxu0 %v43
    %v625 = vpop.f32.mrf.mxu0
    %v626 = vadd.f32 %v606, %v625
    %627 = vdwg.mxu0
    %628 = vmatpush.msra.mxu0 %v297
    %629 = vmatpush.msra.mxu0 %v289
    %630 = vmatpush.msra.mxu0 %v281
    %631 = vmatpush.msra.mxu0 %v273
    %632 = vmatpush.msra.mxu0 %v265
    %633 = vmatpush.msra.mxu0 %v257
    %634 = vmatpush.msra.mxu0 %v249
    %635 = vmatpush.msra.mxu0 %v241
    %636 = vmatpush.msra.mxu0 %v233
    %637 = vmatpush.msra.mxu0 %v225
    %638 = vmatpush.msra.mxu0 %v217
    %639 = vmatpush.msra.mxu0 %v209
    %640 = vmatpush.msra.mxu0 %v201
    %641 = vmatpush.msra.mxu0 %v193
    %642 = vmatpush.msra.mxu0 %v185
    %643 = vmatpush.msra.mxu0 %v177
    %644 = vmatmul.f32.gmra.mxu0 %v42
    %v645 = vpop.f32.mrf.mxu0
    %v646 = vadd.f32 0.0, %v645
    %647 = vdwg.mxu0
    %648 = vmatpush.msra.mxu0 %v425
    %649 = vmatpush.msra.mxu0 %v417
    %650 = vmatpush.msra.mxu0 %v409
    %651 = vmatpush.msra.mxu0 %v401
    %652 = vmatpush.msra.mxu0 %v393
    %653 = vmatpush.msra.mxu0 %v385
    %654 = vmatpush.msra.mxu0 %v377
    %655 = vmatpush.msra.mxu0 %v369
    %656 = vmatpush.msra.mxu0 %v361
    %657 = vmatpush.msra.mxu0 %v353
    %658 = vmatpush.msra.mxu0 %v345
    %659 = vmatpush.msra.mxu0 %v337
    %660 = vmatpush.msra.mxu0 %v329
    %661 = vmatpush.msra.mxu0 %v321
    %662 = vmatpush.msra.mxu0 %v313
    %663 = vmatpush.msra.mxu0 %v305
    %664 = vmatmul.f32.gmra.mxu0 %v43
    %v665 = vpop.f32.mrf.mxu0
    %v666 = vadd.f32 %v646, %v665
    %667 = vdwg.mxu0
    %668 = vmatpush.msra.mxu0 %v298
    %669 = vmatpush.msra.mxu0 %v290
    %670 = vmatpush.msra.mxu0 %v282
    %671 = vmatpush.msra.mxu0 %v274
    %672 = vmatpush.msra.mxu0 %v266
    %673 = vmatpush.msra.mxu0 %v258
    %674 = vmatpush.msra.mxu0 %v250
    %675 = vmatpush.msra.mxu0 %v242
    %676 = vmatpush.msra.mxu0 %v234
    %677 = vmatpush.msra.mxu0 %v226
    %678 = vmatpush.msra.mxu0 %v218
    %679 = vmatpush.msra.mxu0 %v210
    %680 = vmatpush.msra.mxu0 %v202
    %681 = vmatpush.msra.mxu0 %v194
    %682 = vmatpush.msra.mxu0 %v186
    %683 = vmatpush.msra.mxu0 %v178
    %684 = vmatmul.f32.gmra.mxu0 %v42
    %v685 = vpop.f32.mrf.mxu0
    %v686 = vadd.f32 0.0, %v685
    %687 = vdwg.mxu0
    %688 = vmatpush.msra.mxu0 %v426
    %689 = vmatpush.msra.mxu0 %v418
    %690 = vmatpush.msra.mxu0 %v410
    %691 = vmatpush.msra.mxu0 %v402
    %692 = vmatpush.msra.mxu0 %v394
    %693 = vmatpush.msra.mxu0 %v386
    %694 = vmatpush.msra.mxu0 %v378
    %695 = vmatpush.msra.mxu0 %v370
    %696 = vmatpush.msra.mxu0 %v362
    %697 = vmatpush.msra.mxu0 %v354
    %698 = vmatpush.msra.mxu0 %v346
    %699 = vmatpush.msra.mxu0 %v338
    %700 = vmatpush.msra.mxu0 %v330
    %701 = vmatpush.msra.mxu0 %v322
    %702 = vmatpush.msra.mxu0 %v314
    %703 = vmatpush.msra.mxu0 %v306
    %704 = vmatmul.f32.gmra.mxu0 %v43
    %v705 = vpop.f32.mrf.mxu0
    %v706 = vadd.f32 %v686, %v705
    %707 = vdwg.mxu0
    %708 = vmatpush.msra.mxu0 %v299
    %709 = vmatpush.msra.mxu0 %v291
    %710 = vmatpush.msra.mxu0 %v283
    %711 = vmatpush.msra.mxu0 %v275
    %712 = vmatpush.msra.mxu0 %v267
    %713 = vmatpush.msra.mxu0 %v259
    %714 = vmatpush.msra.mxu0 %v251
    %715 = vmatpush.msra.mxu0 %v243
    %716 = vmatpush.msra.mxu0 %v235
    %717 = vmatpush.msra.mxu0 %v227
    %718 = vmatpush.msra.mxu0 %v219
    %719 = vmatpush.msra.mxu0 %v211
    %720 = vmatpush.msra.mxu0 %v203
    %721 = vmatpush.msra.mxu0 %v195
    %722 = vmatpush.msra.mxu0 %v187
    %723 = vmatpush.msra.mxu0 %v179
    %724 = vmatmul.f32.gmra.mxu0 %v42
    %v725 = vpop.f32.mrf.mxu0
    %v726 = vadd.f32 0.0, %v725
    %727 = vdwg.mxu0
    %728 = vmatpush.msra.mxu0 %v427
    %729 = vmatpush.msra.mxu0 %v419
    %730 = vmatpush.msra.mxu0 %v411
    %731 = vmatpush.msra.mxu0 %v403
    %732 = vmatpush.msra.mxu0 %v395
    %733 = vmatpush.msra.mxu0 %v387
    %734 = vmatpush.msra.mxu0 %v379
    %735 = vmatpush.msra.mxu0 %v371
    %736 = vmatpush.msra.mxu0 %v363
    %737 = vmatpush.msra.mxu0 %v355
    %738 = vmatpush.msra.mxu0 %v347
    %739 = vmatpush.msra.mxu0 %v339
    %740 = vmatpush.msra.mxu0 %v331
    %741 = vmatpush.msra.mxu0 %v323
    %742 = vmatpush.msra.mxu0 %v315
    %743 = vmatpush.msra.mxu0 %v307
    %744 = vmatmul.f32.gmra.mxu0 %v43
    %v745 = vpop.f32.mrf.mxu0
    %v746 = vadd.f32 %v726, %v745
    %747 = vdwg.mxu0
    %748 = vst [vmem:[#allocation7] sm:$0xff] %v466
    %749 = vst [vmem:[#allocation7 + $0x8] sm:$0xff] %v506
    %750 = vst [vmem:[#allocation7 + $0x10] sm:$0xff] %v546
    %751 = vst [vmem:[#allocation7 + $0x18] sm:$0xff] %v586
    %752 = vst [vmem:[#allocation7 + $0x20] sm:$0xff] %v626
    %753 = vst [vmem:[#allocation7 + $0x28] sm:$0xff] %v666
    %754 = vst [vmem:[#allocation7 + $0x30] sm:$0xff] %v706
    %755 = vst [vmem:[#allocation7 + $0x38] sm:$0xff] %v746
    // Predicated region
    $region18: #{tpu_custom_call.1} parent=1 // pred_check
      _
    $region19: #{tpu_custom_call.1} parent=1 // pred_check_branch
      %757 = sbr.rel (0) target = $region21
    $region20: #{tpu_custom_call.1} parent=1 // pred_region
      %759 = vsyncadd [#allocation4], 0
      %s761 = sshll.u32 [#allocation7], 4
      %s762 = int_to_ptr.vmem [resolvable:$true] %s761
      %s763 = sshll.u32 %s2, 4
      %s764 = int_to_ptr.hbm [resolvable:$true] %s763
      %766 = dma.vmem_to_hbm [thread:$0]  %s762, 1024, %s764, [#allocation4]
    $region21: #{tpu_custom_call.1} parent=1 // pred_fallthru
      _
    // Predicated region
    $region22: #{tpu_custom_call.1} parent=1 // pred_check
      _
    $region23: #{tpu_custom_call.1} parent=1 // pred_check_branch
      %768 = sbr.rel (0) target = $region25
    $region24: #{tpu_custom_call.1} parent=1 // pred_region
      %770 = dma.done [#allocation4], 1024
    $region25: #{tpu_custom_call.1} parent=1 // pred_fallthru
      _
    %771 = vsyncpa [#allocation3], 1
    %772 = vsyncpa [#allocation6], 1
    %773 = vsyncpa [#allocation4], 1

</llo_original>
